<compile_context>
chip_gen: v7x
topology: tpu7x:2x2x1
jax: 0.10.0
libtpu: 0.0.40
codegen_flags: <defaults>
</compile_context>

<pallas_src>
import jax
import jax.numpy as jnp
from jax.experimental import pallas as pl
from jax.experimental.pallas import tpu as pltpu

BN_EPS = 1e-5


# --------------------------------- kernel ------------------------------------

def _pool_kernel(ns_ref, hid_ref, pos_ref, wf_ref, w1b_ref, c1_ref, w2_ref, c2_ref,
                 out_ref, a1_scr, out_scr):
    """One grid step == one sequence, padded to max_n pedestrians."""
    s = pl.program_id(0)
    n = ns_ref[s]                          # valid pedestrian count (SMEM scalar)
    max_n = hid_ref.shape[1]

    hidden = hid_ref[0]                    # (max_n, H)  bf16
    pos = pos_ref[0]                       # (max_n, 2)  f32
    wf = wf_ref[...]                       # (2, M)      f32  spatial embedding folded into Linear1

    # pos @ Wf with K == 2: keep it on the VPU instead of a wasteful MXU pass.
    pos_wf = pos[:, 0:1] * wf[0:1, :] + pos[:, 1:2] * wf[1:2, :]            # (max_n, M) f32

    # Shared "other pedestrian" term: u[j,:] = hidden[j] @ W1b' + posWf[j,:] + c1'
    u = (jnp.dot(hidden, w1b_ref[...], preferred_element_type=jnp.float32)
         + pos_wf + c1_ref[...])                                            # (max_n, M) f32

    # First Linear+BN+ReLU for ALL (anchor i, other j) pairs:
    #   z1[i*max_n + j, :] = u[j, :] - posWf[i, :]
    # The per-anchor part is a pure (1, M) row broadcast -- no per-anchor matmul.
    for i in range(max_n):
        a1_scr[i * max_n:(i + 1) * max_n, :] = jnp.maximum(u - pos_wf[i:i + 1, :], 0.0)

    # Second Linear+BN+ReLU as ONE fat MXU matmul over all max_n^2 pairs (bf16 in, f32 acc).
    z2 = (jnp.dot(a1_scr[...].astype(jnp.bfloat16), w2_ref[...],
                  preferred_element_type=jnp.float32) + c2_ref[...])        # (max_n^2, B)
    a2 = jnp.maximum(z2, 0.0)

    # Max-pool over valid "other" pedestrians (j < n).  a2 >= 0 after ReLU, so
    # forcing padded rows to 0 is an exact identity for the max.
    j_valid = jax.lax.broadcasted_iota(jnp.int32, (max_n, 1), 0) < n        # (max_n, 1)
    for i in range(max_n):
        blk = jnp.where(j_valid, a2[i * max_n:(i + 1) * max_n, :], 0.0)     # (max_n, B)
        out_scr[i:i + 1, :] = jnp.max(blk, axis=0, keepdims=True)

    out_ref[0] = out_scr[...]              # single dense (max_n, B) store


def _pool_all_sequences(hid_pad, pos_pad, ns_arr, kp):
    """Fused pooling for the whole batch: (num_seq, max_n, H) -> (num_seq, max_n, B)."""
    num_seq, max_n, h_dim = hid_pad.shape
    m_dim = kp["w1b"].shape[1]
    b_dim = kp["w2"].shape[1]

    grid_spec = pltpu.PrefetchScalarGridSpec(
        num_scalar_prefetch=1,                                   # ns_arr -> SMEM
        grid=(num_seq,),
        in_specs=[
            pl.BlockSpec((1, max_n, h_dim), lambda s, ns: (s, 0, 0)),
            pl.BlockSpec((1, max_n, 2), lambda s, ns: (s, 0, 0)),
            # Weights: constant index_map -> DMA'd once, VMEM-resident across the grid.
            pl.BlockSpec(kp["wf"].shape, lambda s, ns: (0, 0)),
            pl.BlockSpec(kp["w1b"].shape, lambda s, ns: (0, 0)),
            pl.BlockSpec(kp["c1"].shape, lambda s, ns: (0, 0)),
            pl.BlockSpec(kp["w2"].shape, lambda s, ns: (0, 0)),
            pl.BlockSpec(kp["c2"].shape, lambda s, ns: (0, 0)),
        ],
        out_specs=pl.BlockSpec((1, max_n, b_dim), lambda s, ns: (s, 0, 0)),
        scratch_shapes=[
            pltpu.VMEM((max_n * max_n, m_dim), jnp.float32),     # all-pairs first-layer acts
            pltpu.VMEM((max_n, b_dim), jnp.float32),             # per-sequence pooled output
        ],
    )
    return pl.pallas_call(
        _pool_kernel,
        out_shape=jax.ShapeDtypeStruct((num_seq, max_n, b_dim), jnp.float32),
        grid_spec=grid_spec,
        compiler_params=pltpu.CompilerParams(
            dimension_semantics=("parallel",)),                  # v7x: shard sequences over 2 TCs
    )(ns_arr, hid_pad, pos_pad, kp["wf"], kp["w1b"], kp["c1"], kp["w2"], kp["c2"])


# ------------------------------ forward wrapper -------------------------------

def pool_hidden_net_forward(h_states, seq_start_end, end_pos, kernel_params, h_dim):
    """Mirrors PoolHiddenNet.forward.  seq_start_end is a host-side list of
    (start, end) python ints (PyTorch calls .item() on them)."""
    h_flat = h_states.reshape(-1, h_dim)
    bottleneck = kernel_params["w2"].shape[1]
    ns = [int(e) - int(s) for s, e in seq_start_end]

    # Pad every sequence to a common max_n (rounded to a sublane multiple of 8) so ONE
    # pallas_call serves the whole batch and varying pedestrian counts never recompile.
    max_n = ((max(ns) + 7) // 8) * 8

    hid_blocks, pos_blocks = [], []
    for (start, end) in seq_start_end:
        n = end - start
        pad = max_n - n
        hid_blocks.append(jnp.pad(h_flat[start:end], ((0, pad), (0, 0))))
        pos_blocks.append(jnp.pad(end_pos[start:end], ((0, pad), (0, 0))))
    hid_pad = jnp.stack(hid_blocks).astype(jnp.bfloat16)         # (num_seq, max_n, H)
    pos_pad = jnp.stack(pos_blocks).astype(jnp.float32)          # (num_seq, max_n, 2)
    ns_arr = jnp.asarray(ns, dtype=jnp.int32)

    pooled = _pool_all_sequences(hid_pad, pos_pad, ns_arr, kernel_params)

    # Final assembly (host glue): valid rows per sequence; num_ped==1 is a pass-through.
    outs = []
    for idx, (start, end) in enumerate(seq_start_end):
        n = end - start
        if n > 1:
            outs.append(pooled[idx, :n])
        else:
            # Pass-through branch (pure slice, no compute), as in the PyTorch module.
            assert h_dim == bottleneck, "num_ped==1 pass-through needs h_dim == bottleneck_dim"
            outs.append(h_flat[start:end])
    return jnp.concatenate(outs, axis=0)


# ----------------------------- parameter setup --------------------------------

def init_raw_params(key, emb_dim, h_dim, mlp_dim, bottleneck_dim):
    ks = jax.random.split(key, 5)

    def linear(k, fi, fo):
        kw, kb = jax.random.split(k)
        bound = 1.0 / (fi ** 0.5)
        w = jax.random.uniform(kw, (fi, fo), jnp.float32, -bound, bound)
        b = jax.random.uniform(kb, (fo,), jnp.float32, -bound, bound)
        return w, b

    def bn(k, d):
        kg, kb, km, kv = jax.random.split(k, 4)
        g = 1.0 + 0.1 * jax.random.normal(kg, (d,), jnp.float32)
        b = 0.1 * jax.random.normal(kb, (d,), jnp.float32)
        m = 0.1 * jax.random.normal(km, (d,), jnp.float32)
        v = jnp.abs(1.0 + 0.1 * jax.random.normal(kv, (d,), jnp.float32))
        return g, b, m, v

    wse, bse = linear(ks[0], 2, emb_dim)
    w1, b1 = linear(ks[1], emb_dim + h_dim, mlp_dim)
    w2, b2 = linear(ks[2], mlp_dim, bottleneck_dim)
    g1, be1, m1, v1 = bn(ks[3], mlp_dim)
    g2, be2, m2, v2 = bn(ks[4], bottleneck_dim)
    return dict(wse=wse, bse=bse, w1=w1, b1=b1, g1=g1, be1=be1, m1=m1, v1=v1,
                w2=w2, b2=b2, g2=g2, be2=be2, m2=m2, v2=v2)


def make_kernel_params(raw, emb_dim):
    """Fold eval-mode BatchNorm AND the spatial_embedding Linear into the MLP weights.

    BN (eval): y = x*s + t with s = g/sqrt(v+eps), t = beta - mean*s.
    There is no nonlinearity between spatial_embedding and mlp_pre_pool's first Linear,
    so  emb @ W1a == rel @ (wse @ W1a) + bse @ W1a  folds exactly.
    """
    s1 = raw["g1"] / jnp.sqrt(raw["v1"] + BN_EPS)
    t1 = raw["be1"] - raw["m1"] * s1
    s2 = raw["g2"] / jnp.sqrt(raw["v2"] + BN_EPS)
    t2 = raw["be2"] - raw["m2"] * s2

    w1a = raw["w1"][:emb_dim] * s1[None, :]          # (E, M)  BN folded in
    w1b = raw["w1"][emb_dim:] * s1[None, :]          # (H, M)
    wf = raw["wse"] @ w1a                            # (2, M)  spatial embedding folded in
    c1 = raw["bse"] @ w1a + raw["b1"] * s1 + t1      # (M,)
    w2 = raw["w2"] * s2[None, :]                     # (M, B)
    c2 = raw["b2"] * s2 + t2                         # (B,)
    return dict(
        wf=wf.astype(jnp.float32),                   # used on the VPU in f32
        w1b=w1b.astype(jnp.bfloat16),                # bf16 MXU operands, f32 accumulation
        c1=c1[None, :].astype(jnp.float32),
        w2=w2.astype(jnp.bfloat16),
        c2=c2[None, :].astype(jnp.float32),
    )


# ------------------------------- pure-JAX ref ----------------------------------

def reference_forward(h_states, seq_start_end, end_pos, raw, h_dim):
    h_flat = h_states.reshape(-1, h_dim)
    outs = []
    for start, end in seq_start_end:
        n = end - start
        if n > 1:
            hid = h_flat[start:end]
            pos = end_pos[start:end]
            hid1 = jnp.tile(hid, (n, 1))
            pos1 = jnp.tile(pos, (n, 1))
            pos2 = jnp.repeat(pos, n, axis=0)
            rel = pos1 - pos2
            rel_emb = rel @ raw["wse"] + raw["bse"]
            x = jnp.concatenate([rel_emb, hid1], axis=1)
            z1 = x @ raw["w1"] + raw["b1"]
            z1 = (z1 - raw["m1"]) / jnp.sqrt(raw["v1"] + BN_EPS) * raw["g1"] + raw["be1"]
            a1 = jnp.maximum(z1, 0.0)
            z2 = a1 @ raw["w2"] + raw["b2"]
            z2 = (z2 - raw["m2"]) / jnp.sqrt(raw["v2"] + BN_EPS) * raw["g2"] + raw["be2"]
            a2 = jnp.maximum(z2, 0.0)
            outs.append(a2.reshape(n, n, -1).max(axis=1))
        else:
            outs.append(h_flat[start:end])
    return jnp.concatenate(outs, axis=0)


# ----------------------------------- main --------------------------------------

if __name__ == "__main__":
    EMB_DIM, H_DIM, MLP_DIM, BOTTLENECK = 16, 32, 64, 32   # h_dim == bottleneck so the
    BATCH = 8                                               # num_ped==1 branch concatenates
    SEQ_START_END = [(0, 3), (3, 4), (4, 8)]                # num_ped = 3, 1, 4

    key = jax.random.PRNGKey(0)
    kh, kpos, kw = jax.random.split(key, 3)
    h_states = jax.random.normal(kh, (1, BATCH, H_DIM), dtype=jnp.float32)
    end_pos = jax.random.normal(kpos, (BATCH, 2), dtype=jnp.float32)

    raw = init_raw_params(kw, EMB_DIM, H_DIM, MLP_DIM, BOTTLENECK)
    kernel_params = make_kernel_params(raw, EMB_DIM)

    out = pool_hidden_net_forward(h_states, SEQ_START_END, end_pos, kernel_params, H_DIM)
    out = jax.block_until_ready(out)
    assert out.shape == (BATCH, BOTTLENECK), out.shape

    ref = jax.block_until_ready(
        reference_forward(h_states, SEQ_START_END, end_pos, raw, H_DIM))
    if not bool(jnp.allclose(out, ref, rtol=2e-2, atol=2e-2)):
        raise AssertionError(
            f"mismatch vs reference, max |diff| = {float(jnp.max(jnp.abs(out - ref)))}")

    print("KERNEL_OK")
</pallas_src>

<mosaic_0001>
module attributes {stable_mosaic.version = 11 : i64} {
  func.func @_pool_kernel(%arg0: i32, %arg1: memref<3xi32, #tpu.memory_space<smem>>, %arg2: memref<1x8x32xbf16, #tpu.memory_space<vmem>>, %arg3: memref<1x8x2xf32, #tpu.memory_space<vmem>>, %arg4: memref<2x64xf32, #tpu.memory_space<vmem>>, %arg5: memref<32x64xbf16, #tpu.memory_space<vmem>>, %arg6: memref<1x64xf32, #tpu.memory_space<vmem>>, %arg7: memref<64x32xbf16, #tpu.memory_space<vmem>>, %arg8: memref<1x32xf32, #tpu.memory_space<vmem>>, %arg9: memref<1x8x32xf32, #tpu.memory_space<vmem>>, %arg10: memref<64x64xf32, #tpu.memory_space<vmem>>, %arg11: memref<8x32xf32, #tpu.memory_space<vmem>>) attributes {dimension_semantics = [#tpu.dimension_semantics<parallel>], iteration_bounds = array<i64: 3>, scalar_prefetch = 1 : i64, scratch_operands = 2 : i64, tpu.core_type = #tpu.core_type<tc>, window_params = [{transform_indices = @transform_0, window_bounds = array<i64: 1, 8, 32>}, {transform_indices = @transform_1, window_bounds = array<i64: 1, 8, 2>}, {pipeline_mode = #tpu.pipeline_mode<synchronous>, transform_indices = @transform_2, window_bounds = array<i64: 2, 64>}, {pipeline_mode = #tpu.pipeline_mode<synchronous>, transform_indices = @transform_3, window_bounds = array<i64: 32, 64>}, {pipeline_mode = #tpu.pipeline_mode<synchronous>, transform_indices = @transform_4, window_bounds = array<i64: 1, 64>}, {pipeline_mode = #tpu.pipeline_mode<synchronous>, transform_indices = @transform_5, window_bounds = array<i64: 64, 32>}, {pipeline_mode = #tpu.pipeline_mode<synchronous>, transform_indices = @transform_6, window_bounds = array<i64: 1, 32>}, {transform_indices = @transform_7, window_bounds = array<i64: 1, 8, 32>}]} {
    %0 = arith.index_cast %arg0 : i32 to index
    %1 = memref.load %arg1[%0] : memref<3xi32, #tpu.memory_space<smem>>
    %c0 = arith.constant 0 : index
    %c0_0 = arith.constant 0 : index
    %c0_1 = arith.constant 0 : index
    %2 = vector.load %arg2[%c0, %c0_0, %c0_1] : memref<1x8x32xbf16, #tpu.memory_space<vmem>>, vector<1x8x32xbf16>
    %3 = vector.shape_cast %2 : vector<1x8x32xbf16> to vector<8x32xbf16>
    %c0_2 = arith.constant 0 : index
    %c0_3 = arith.constant 0 : index
    %c0_4 = arith.constant 0 : index
    %4 = vector.load %arg3[%c0_2, %c0_3, %c0_4] : memref<1x8x2xf32, #tpu.memory_space<vmem>>, vector<1x8x2xf32>
    %5 = vector.shape_cast %4 : vector<1x8x2xf32> to vector<8x2xf32>
    %c0_5 = arith.constant 0 : index
    %c0_6 = arith.constant 0 : index
    %6 = vector.load %arg4[%c0_5, %c0_6] : memref<2x64xf32, #tpu.memory_space<vmem>>, vector<2x64xf32>
    %7 = vector.extract_strided_slice %5 {offsets = [0, 0], sizes = [8, 1], strides = [1, 1]} : vector<8x2xf32> to vector<8x1xf32>
    %8 = vector.extract_strided_slice %6 {offsets = [0, 0], sizes = [1, 64], strides = [1, 1]} : vector<2x64xf32> to vector<1x64xf32>
    %9 = vector.broadcast %7 : vector<8x1xf32> to vector<8x64xf32>
    %10 = vector.broadcast %8 : vector<1x64xf32> to vector<8x64xf32>
    %11 = arith.mulf %9, %10 : vector<8x64xf32>
    %12 = vector.extract_strided_slice %5 {offsets = [0, 1], sizes = [8, 1], strides = [1, 1]} : vector<8x2xf32> to vector<8x1xf32>
    %13 = vector.extract_strided_slice %6 {offsets = [1, 0], sizes = [1, 64], strides = [1, 1]} : vector<2x64xf32> to vector<1x64xf32>
    %14 = vector.broadcast %12 : vector<8x1xf32> to vector<8x64xf32>
    %15 = vector.broadcast %13 : vector<1x64xf32> to vector<8x64xf32>
    %16 = arith.mulf %14, %15 : vector<8x64xf32>
    %17 = arith.addf %11, %16 : vector<8x64xf32>
    %c0_7 = arith.constant 0 : index
    %c0_8 = arith.constant 0 : index
    %18 = vector.load %arg5[%c0_7, %c0_8] : memref<32x64xbf16, #tpu.memory_space<vmem>>, vector<32x64xbf16>
    %cst = arith.constant dense<0.000000e+00> : vector<8x64xf32>
    %19 = tpu.matmul %3, %18, %cst {dimension_numbers = #tpu.dot_dimension_numbers<[1], [0], [0], [1], [0, 0, 1, 1], [], []>} : vector<8x32xbf16>, vector<32x64xbf16>, vector<8x64xf32> -> vector<8x64xf32>
    %20 = arith.addf %19, %17 : vector<8x64xf32>
    %c0_9 = arith.constant 0 : index
    %c0_10 = arith.constant 0 : index
    %21 = vector.load %arg6[%c0_9, %c0_10] : memref<1x64xf32, #tpu.memory_space<vmem>>, vector<1x64xf32>
    %22 = vector.broadcast %21 : vector<1x64xf32> to vector<8x64xf32>
    %23 = arith.addf %20, %22 : vector<8x64xf32>
    %24 = vector.extract_strided_slice %17 {offsets = [0, 0], sizes = [1, 64], strides = [1, 1]} : vector<8x64xf32> to vector<1x64xf32>
    %25 = vector.broadcast %24 : vector<1x64xf32> to vector<8x64xf32>
    %26 = arith.subf %23, %25 : vector<8x64xf32>
    %cst_11 = arith.constant 0.000000e+00 : f32
    %27 = vector.broadcast %cst_11 : f32 to vector<8x64xf32>
    %28 = arith.maximumf %26, %27 : vector<8x64xf32>
    %c0_12 = arith.constant 0 : index
    %c0_13 = arith.constant 0 : index
    %29 = vector.load %arg10[%c0_12, %c0_13] : memref<64x64xf32, #tpu.memory_space<vmem>>, vector<8x64xf32>
    tpu.vector_store %arg10[%c0_12, %c0_13], %28 {strides = array<i32>} : memref<64x64xf32, #tpu.memory_space<vmem>>, vector<8x64xf32>,
    %30 = vector.extract_strided_slice %17 {offsets = [1, 0], sizes = [1, 64], strides = [1, 1]} : vector<8x64xf32> to vector<1x64xf32>
    %31 = vector.broadcast %30 : vector<1x64xf32> to vector<8x64xf32>
    %32 = arith.subf %23, %31 : vector<8x64xf32>
    %cst_14 = arith.constant 0.000000e+00 : f32
    %33 = vector.broadcast %cst_14 : f32 to vector<8x64xf32>
    %34 = arith.maximumf %32, %33 : vector<8x64xf32>
    %c8 = arith.constant 8 : index
    %c0_15 = arith.constant 0 : index
    %35 = vector.load %arg10[%c8, %c0_15] : memref<64x64xf32, #tpu.memory_space<vmem>>, vector<8x64xf32>
    tpu.vector_store %arg10[%c8, %c0_15], %34 {strides = array<i32>} : memref<64x64xf32, #tpu.memory_space<vmem>>, vector<8x64xf32>,
    %36 = vector.extract_strided_slice %17 {offsets = [2, 0], sizes = [1, 64], strides = [1, 1]} : vector<8x64xf32> to vector<1x64xf32>
    %37 = vector.broadcast %36 : vector<1x64xf32> to vector<8x64xf32>
    %38 = arith.subf %23, %37 : vector<8x64xf32>
    %cst_16 = arith.constant 0.000000e+00 : f32
    %39 = vector.broadcast %cst_16 : f32 to vector<8x64xf32>
    %40 = arith.maximumf %38, %39 : vector<8x64xf32>
    %c16 = arith.constant 16 : index
    %c0_17 = arith.constant 0 : index
    %41 = vector.load %arg10[%c16, %c0_17] : memref<64x64xf32, #tpu.memory_space<vmem>>, vector<8x64xf32>
    tpu.vector_store %arg10[%c16, %c0_17], %40 {strides = array<i32>} : memref<64x64xf32, #tpu.memory_space<vmem>>, vector<8x64xf32>,
    %42 = vector.extract_strided_slice %17 {offsets = [3, 0], sizes = [1, 64], strides = [1, 1]} : vector<8x64xf32> to vector<1x64xf32>
    %43 = vector.broadcast %42 : vector<1x64xf32> to vector<8x64xf32>
    %44 = arith.subf %23, %43 : vector<8x64xf32>
    %cst_18 = arith.constant 0.000000e+00 : f32
    %45 = vector.broadcast %cst_18 : f32 to vector<8x64xf32>
    %46 = arith.maximumf %44, %45 : vector<8x64xf32>
    %c24 = arith.constant 24 : index
    %c0_19 = arith.constant 0 : index
    %47 = vector.load %arg10[%c24, %c0_19] : memref<64x64xf32, #tpu.memory_space<vmem>>, vector<8x64xf32>
    tpu.vector_store %arg10[%c24, %c0_19], %46 {strides = array<i32>} : memref<64x64xf32, #tpu.memory_space<vmem>>, vector<8x64xf32>,
    %48 = vector.extract_strided_slice %17 {offsets = [4, 0], sizes = [1, 64], strides = [1, 1]} : vector<8x64xf32> to vector<1x64xf32>
    %49 = vector.broadcast %48 : vector<1x64xf32> to vector<8x64xf32>
    %50 = arith.subf %23, %49 : vector<8x64xf32>
    %cst_20 = arith.constant 0.000000e+00 : f32
    %51 = vector.broadcast %cst_20 : f32 to vector<8x64xf32>
    %52 = arith.maximumf %50, %51 : vector<8x64xf32>
    %c32 = arith.constant 32 : index
    %c0_21 = arith.constant 0 : index
    %53 = vector.load %arg10[%c32, %c0_21] : memref<64x64xf32, #tpu.memory_space<vmem>>, vector<8x64xf32>
    tpu.vector_store %arg10[%c32, %c0_21], %52 {strides = array<i32>} : memref<64x64xf32, #tpu.memory_space<vmem>>, vector<8x64xf32>,
    %54 = vector.extract_strided_slice %17 {offsets = [5, 0], sizes = [1, 64], strides = [1, 1]} : vector<8x64xf32> to vector<1x64xf32>
    %55 = vector.broadcast %54 : vector<1x64xf32> to vector<8x64xf32>
    %56 = arith.subf %23, %55 : vector<8x64xf32>
    %cst_22 = arith.constant 0.000000e+00 : f32
    %57 = vector.broadcast %cst_22 : f32 to vector<8x64xf32>
    %58 = arith.maximumf %56, %57 : vector<8x64xf32>
    %c40 = arith.constant 40 : index
    %c0_23 = arith.constant 0 : index
    %59 = vector.load %arg10[%c40, %c0_23] : memref<64x64xf32, #tpu.memory_space<vmem>>, vector<8x64xf32>
    tpu.vector_store %arg10[%c40, %c0_23], %58 {strides = array<i32>} : memref<64x64xf32, #tpu.memory_space<vmem>>, vector<8x64xf32>,
    %60 = vector.extract_strided_slice %17 {offsets = [6, 0], sizes = [1, 64], strides = [1, 1]} : vector<8x64xf32> to vector<1x64xf32>
    %61 = vector.broadcast %60 : vector<1x64xf32> to vector<8x64xf32>
    %62 = arith.subf %23, %61 : vector<8x64xf32>
    %cst_24 = arith.constant 0.000000e+00 : f32
    %63 = vector.broadcast %cst_24 : f32 to vector<8x64xf32>
    %64 = arith.maximumf %62, %63 : vector<8x64xf32>
    %c48 = arith.constant 48 : index
    %c0_25 = arith.constant 0 : index
    %65 = vector.load %arg10[%c48, %c0_25] : memref<64x64xf32, #tpu.memory_space<vmem>>, vector<8x64xf32>
    tpu.vector_store %arg10[%c48, %c0_25], %64 {strides = array<i32>} : memref<64x64xf32, #tpu.memory_space<vmem>>, vector<8x64xf32>,
    %66 = vector.extract_strided_slice %17 {offsets = [7, 0], sizes = [1, 64], strides = [1, 1]} : vector<8x64xf32> to vector<1x64xf32>
    %67 = vector.broadcast %66 : vector<1x64xf32> to vector<8x64xf32>
    %68 = arith.subf %23, %67 : vector<8x64xf32>
    %cst_26 = arith.constant 0.000000e+00 : f32
    %69 = vector.broadcast %cst_26 : f32 to vector<8x64xf32>
    %70 = arith.maximumf %68, %69 : vector<8x64xf32>
    %c56 = arith.constant 56 : index
    %c0_27 = arith.constant 0 : index
    %71 = vector.load %arg10[%c56, %c0_27] : memref<64x64xf32, #tpu.memory_space<vmem>>, vector<8x64xf32>
    tpu.vector_store %arg10[%c56, %c0_27], %70 {strides = array<i32>} : memref<64x64xf32, #tpu.memory_space<vmem>>, vector<8x64xf32>,
    %c0_28 = arith.constant 0 : index
    %c0_29 = arith.constant 0 : index
    %72 = vector.load %arg10[%c0_28, %c0_29] : memref<64x64xf32, #tpu.memory_space<vmem>>, vector<64x64xf32>
    %73 = arith.truncf %72 : vector<64x64xf32> to vector<64x64xbf16>
    %c0_30 = arith.constant 0 : index
    %c0_31 = arith.constant 0 : index
    %74 = vector.load %arg7[%c0_30, %c0_31] : memref<64x32xbf16, #tpu.memory_space<vmem>>, vector<64x32xbf16>
    %cst_32 = arith.constant dense<0.000000e+00> : vector<64x32xf32>
    %75 = tpu.matmul %73, %74, %cst_32 {dimension_numbers = #tpu.dot_dimension_numbers<[1], [0], [0], [1], [0, 0, 1, 1], [], []>} : vector<64x64xbf16>, vector<64x32xbf16>, vector<64x32xf32> -> vector<64x32xf32>
    %c0_33 = arith.constant 0 : index
    %c0_34 = arith.constant 0 : index
    %76 = vector.load %arg8[%c0_33, %c0_34] : memref<1x32xf32, #tpu.memory_space<vmem>>, vector<1x32xf32>
    %77 = vector.broadcast %76 : vector<1x32xf32> to vector<64x32xf32>
    %78 = arith.addf %75, %77 : vector<64x32xf32>
    %cst_35 = arith.constant 0.000000e+00 : f32
    %79 = vector.broadcast %cst_35 : f32 to vector<64x32xf32>
    %80 = arith.maximumf %78, %79 : vector<64x32xf32>
    %81 = tpu.iota {dimensions = array<i32: 0>} : vector<8x1xi32>
    %82 = vector.broadcast %1 : i32 to vector<8x1xi32>
    %83 = arith.cmpi slt, %81, %82 : vector<8x1xi32>
    %84 = vector.extract_strided_slice %80 {offsets = [0, 0], sizes = [8, 32], strides = [1, 1]} : vector<64x32xf32> to vector<8x32xf32>
    %cst_36 = arith.constant 0.000000e+00 : f32
    %85 = vector.shape_cast %83 : vector<8x1xi1> to vector<8x1xi1>
    %86 = vector.broadcast %85 : vector<8x1xi1> to vector<8x32xi1>
    %87 = vector.broadcast %cst_36 : f32 to vector<8x32xf32>
    %88 = arith.select %86, %84, %87 : vector<8x32xi1>, vector<8x32xf32>
    %cst_37 = arith.constant dense<0xFF800000> : vector<32xf32>
    %89 = vector.multi_reduction <maximumf>, %88, %cst_37 [0] : vector<8x32xf32> to vector<32xf32>
    %90 = vector.shape_cast %89 : vector<32xf32> to vector<1x32xf32>
    %c0_38 = arith.constant 0 : index
    %c0_39 = arith.constant 0 : index
    %91 = vector.load %arg11[%c0_38, %c0_39] : memref<8x32xf32, #tpu.memory_space<vmem>>, vector<1x32xf32>
    tpu.vector_store %arg11[%c0_38, %c0_39], %90 {strides = array<i32>} : memref<8x32xf32, #tpu.memory_space<vmem>>, vector<1x32xf32>,
    %92 = vector.extract_strided_slice %80 {offsets = [8, 0], sizes = [8, 32], strides = [1, 1]} : vector<64x32xf32> to vector<8x32xf32>
    %cst_40 = arith.constant 0.000000e+00 : f32
    %93 = vector.shape_cast %83 : vector<8x1xi1> to vector<8x1xi1>
    %94 = vector.broadcast %93 : vector<8x1xi1> to vector<8x32xi1>
    %95 = vector.broadcast %cst_40 : f32 to vector<8x32xf32>
    %96 = arith.select %94, %92, %95 : vector<8x32xi1>, vector<8x32xf32>
    %cst_41 = arith.constant dense<0xFF800000> : vector<32xf32>
    %97 = vector.multi_reduction <maximumf>, %96, %cst_41 [0] : vector<8x32xf32> to vector<32xf32>
    %98 = vector.shape_cast %97 : vector<32xf32> to vector<1x32xf32>
    %c1 = arith.constant 1 : index
    %c0_42 = arith.constant 0 : index
    %99 = vector.load %arg11[%c1, %c0_42] : memref<8x32xf32, #tpu.memory_space<vmem>>, vector<1x32xf32>
    tpu.vector_store %arg11[%c1, %c0_42], %98 {strides = array<i32>} : memref<8x32xf32, #tpu.memory_space<vmem>>, vector<1x32xf32>,
    %100 = vector.extract_strided_slice %80 {offsets = [16, 0], sizes = [8, 32], strides = [1, 1]} : vector<64x32xf32> to vector<8x32xf32>
    %cst_43 = arith.constant 0.000000e+00 : f32
    %101 = vector.shape_cast %83 : vector<8x1xi1> to vector<8x1xi1>
    %102 = vector.broadcast %101 : vector<8x1xi1> to vector<8x32xi1>
    %103 = vector.broadcast %cst_43 : f32 to vector<8x32xf32>
    %104 = arith.select %102, %100, %103 : vector<8x32xi1>, vector<8x32xf32>
    %cst_44 = arith.constant dense<0xFF800000> : vector<32xf32>
    %105 = vector.multi_reduction <maximumf>, %104, %cst_44 [0] : vector<8x32xf32> to vector<32xf32>
    %106 = vector.shape_cast %105 : vector<32xf32> to vector<1x32xf32>
    %c2 = arith.constant 2 : index
    %c0_45 = arith.constant 0 : index
    %107 = vector.load %arg11[%c2, %c0_45] : memref<8x32xf32, #tpu.memory_space<vmem>>, vector<1x32xf32>
    tpu.vector_store %arg11[%c2, %c0_45], %106 {strides = array<i32>} : memref<8x32xf32, #tpu.memory_space<vmem>>, vector<1x32xf32>,
    %108 = vector.extract_strided_slice %80 {offsets = [24, 0], sizes = [8, 32], strides = [1, 1]} : vector<64x32xf32> to vector<8x32xf32>
    %cst_46 = arith.constant 0.000000e+00 : f32
    %109 = vector.shape_cast %83 : vector<8x1xi1> to vector<8x1xi1>
    %110 = vector.broadcast %109 : vector<8x1xi1> to vector<8x32xi1>
    %111 = vector.broadcast %cst_46 : f32 to vector<8x32xf32>
    %112 = arith.select %110, %108, %111 : vector<8x32xi1>, vector<8x32xf32>
    %cst_47 = arith.constant dense<0xFF800000> : vector<32xf32>
    %113 = vector.multi_reduction <maximumf>, %112, %cst_47 [0] : vector<8x32xf32> to vector<32xf32>
    %114 = vector.shape_cast %113 : vector<32xf32> to vector<1x32xf32>
    %c3 = arith.constant 3 : index
    %c0_48 = arith.constant 0 : index
    %115 = vector.load %arg11[%c3, %c0_48] : memref<8x32xf32, #tpu.memory_space<vmem>>, vector<1x32xf32>
    tpu.vector_store %arg11[%c3, %c0_48], %114 {strides = array<i32>} : memref<8x32xf32, #tpu.memory_space<vmem>>, vector<1x32xf32>,
    %116 = vector.extract_strided_slice %80 {offsets = [32, 0], sizes = [8, 32], strides = [1, 1]} : vector<64x32xf32> to vector<8x32xf32>
    %cst_49 = arith.constant 0.000000e+00 : f32
    %117 = vector.shape_cast %83 : vector<8x1xi1> to vector<8x1xi1>
    %118 = vector.broadcast %117 : vector<8x1xi1> to vector<8x32xi1>
    %119 = vector.broadcast %cst_49 : f32 to vector<8x32xf32>
    %120 = arith.select %118, %116, %119 : vector<8x32xi1>, vector<8x32xf32>
    %cst_50 = arith.constant dense<0xFF800000> : vector<32xf32>
    %121 = vector.multi_reduction <maximumf>, %120, %cst_50 [0] : vector<8x32xf32> to vector<32xf32>
    %122 = vector.shape_cast %121 : vector<32xf32> to vector<1x32xf32>
    %c4 = arith.constant 4 : index
    %c0_51 = arith.constant 0 : index
    %123 = vector.load %arg11[%c4, %c0_51] : memref<8x32xf32, #tpu.memory_space<vmem>>, vector<1x32xf32>
    tpu.vector_store %arg11[%c4, %c0_51], %122 {strides = array<i32>} : memref<8x32xf32, #tpu.memory_space<vmem>>, vector<1x32xf32>,
    %124 = vector.extract_strided_slice %80 {offsets = [40, 0], sizes = [8, 32], strides = [1, 1]} : vector<64x32xf32> to vector<8x32xf32>
    %cst_52 = arith.constant 0.000000e+00 : f32
    %125 = vector.shape_cast %83 : vector<8x1xi1> to vector<8x1xi1>
    %126 = vector.broadcast %125 : vector<8x1xi1> to vector<8x32xi1>
    %127 = vector.broadcast %cst_52 : f32 to vector<8x32xf32>
    %128 = arith.select %126, %124, %127 : vector<8x32xi1>, vector<8x32xf32>
    %cst_53 = arith.constant dense<0xFF800000> : vector<32xf32>
    %129 = vector.multi_reduction <maximumf>, %128, %cst_53 [0] : vector<8x32xf32> to vector<32xf32>
    %130 = vector.shape_cast %129 : vector<32xf32> to vector<1x32xf32>
    %c5 = arith.constant 5 : index
    %c0_54 = arith.constant 0 : index
    %131 = vector.load %arg11[%c5, %c0_54] : memref<8x32xf32, #tpu.memory_space<vmem>>, vector<1x32xf32>
    tpu.vector_store %arg11[%c5, %c0_54], %130 {strides = array<i32>} : memref<8x32xf32, #tpu.memory_space<vmem>>, vector<1x32xf32>,
    %132 = vector.extract_strided_slice %80 {offsets = [48, 0], sizes = [8, 32], strides = [1, 1]} : vector<64x32xf32> to vector<8x32xf32>
    %cst_55 = arith.constant 0.000000e+00 : f32
    %133 = vector.shape_cast %83 : vector<8x1xi1> to vector<8x1xi1>
    %134 = vector.broadcast %133 : vector<8x1xi1> to vector<8x32xi1>
    %135 = vector.broadcast %cst_55 : f32 to vector<8x32xf32>
    %136 = arith.select %134, %132, %135 : vector<8x32xi1>, vector<8x32xf32>
    %cst_56 = arith.constant dense<0xFF800000> : vector<32xf32>
    %137 = vector.multi_reduction <maximumf>, %136, %cst_56 [0] : vector<8x32xf32> to vector<32xf32>
    %138 = vector.shape_cast %137 : vector<32xf32> to vector<1x32xf32>
    %c6 = arith.constant 6 : index
    %c0_57 = arith.constant 0 : index
    %139 = vector.load %arg11[%c6, %c0_57] : memref<8x32xf32, #tpu.memory_space<vmem>>, vector<1x32xf32>
    tpu.vector_store %arg11[%c6, %c0_57], %138 {strides = array<i32>} : memref<8x32xf32, #tpu.memory_space<vmem>>, vector<1x32xf32>,
    %140 = vector.extract_strided_slice %80 {offsets = [56, 0], sizes = [8, 32], strides = [1, 1]} : vector<64x32xf32> to vector<8x32xf32>
    %cst_58 = arith.constant 0.000000e+00 : f32
    %141 = vector.shape_cast %83 : vector<8x1xi1> to vector<8x1xi1>
    %142 = vector.broadcast %141 : vector<8x1xi1> to vector<8x32xi1>
    %143 = vector.broadcast %cst_58 : f32 to vector<8x32xf32>
    %144 = arith.select %142, %140, %143 : vector<8x32xi1>, vector<8x32xf32>
    %cst_59 = arith.constant dense<0xFF800000> : vector<32xf32>
    %145 = vector.multi_reduction <maximumf>, %144, %cst_59 [0] : vector<8x32xf32> to vector<32xf32>
    %146 = vector.shape_cast %145 : vector<32xf32> to vector<1x32xf32>
    %c7 = arith.constant 7 : index
    %c0_60 = arith.constant 0 : index
    %147 = vector.load %arg11[%c7, %c0_60] : memref<8x32xf32, #tpu.memory_space<vmem>>, vector<1x32xf32>
    tpu.vector_store %arg11[%c7, %c0_60], %146 {strides = array<i32>} : memref<8x32xf32, #tpu.memory_space<vmem>>, vector<1x32xf32>,
    %c0_61 = arith.constant 0 : index
    %c0_62 = arith.constant 0 : index
    %148 = vector.load %arg11[%c0_61, %c0_62] : memref<8x32xf32, #tpu.memory_space<vmem>>, vector<8x32xf32>
    %c0_63 = arith.constant 0 : index
    %c0_64 = arith.constant 0 : index
    %c0_65 = arith.constant 0 : index
    %149 = vector.load %arg9[%c0_63, %c0_64, %c0_65] : memref<1x8x32xf32, #tpu.memory_space<vmem>>, vector<1x8x32xf32>
    %150 = vector.shape_cast %149 : vector<1x8x32xf32> to vector<8x32xf32>
    %151 = vector.shape_cast %148 : vector<8x32xf32> to vector<1x8x32xf32>
    tpu.vector_store %arg9[%c0_63, %c0_64, %c0_65], %151 {strides = array<i32>} : memref<1x8x32xf32, #tpu.memory_space<vmem>>, vector<1x8x32xf32>,
    return
  }
  func.func @transform_0(%arg0: i32, %arg1: memref<3xi32, #tpu.memory_space<smem>>) -> (i32, i32, i32) {
    %c0_i32 = arith.constant 0 : i32
    %c0_i32_0 = arith.constant 0 : i32
    %c0_i32_1 = arith.constant 0 : i32
    return %arg0, %c0_i32, %c0_i32_0 : i32, i32, i32
  }
  func.func @transform_1(%arg0: i32, %arg1: memref<3xi32, #tpu.memory_space<smem>>) -> (i32, i32, i32) {
    %c0_i32 = arith.constant 0 : i32
    %c0_i32_0 = arith.constant 0 : i32
    %c0_i32_1 = arith.constant 0 : i32
    return %arg0, %c0_i32, %c0_i32_0 : i32, i32, i32
  }
  func.func @transform_2(%arg0: i32, %arg1: memref<3xi32, #tpu.memory_space<smem>>) -> (i32, i32) {
    %c0_i32 = arith.constant 0 : i32
    %c0_i32_0 = arith.constant 0 : i32
    %c0_i32_1 = arith.constant 0 : i32
    return %c0_i32, %c0_i32_0 : i32, i32
  }
  func.func @transform_3(%arg0: i32, %arg1: memref<3xi32, #tpu.memory_space<smem>>) -> (i32, i32) {
    %c0_i32 = arith.constant 0 : i32
    %c0_i32_0 = arith.constant 0 : i32
    %c0_i32_1 = arith.constant 0 : i32
    return %c0_i32, %c0_i32_0 : i32, i32
  }
  func.func @transform_4(%arg0: i32, %arg1: memref<3xi32, #tpu.memory_space<smem>>) -> (i32, i32) {
    %c0_i32 = arith.constant 0 : i32
    %c0_i32_0 = arith.constant 0 : i32
    %c0_i32_1 = arith.constant 0 : i32
    return %c0_i32, %c0_i32_0 : i32, i32
  }
  func.func @transform_5(%arg0: i32, %arg1: memref<3xi32, #tpu.memory_space<smem>>) -> (i32, i32) {
    %c0_i32 = arith.constant 0 : i32
    %c0_i32_0 = arith.constant 0 : i32
    %c0_i32_1 = arith.constant 0 : i32
    return %c0_i32, %c0_i32_0 : i32, i32
  }
  func.func @transform_6(%arg0: i32, %arg1: memref<3xi32, #tpu.memory_space<smem>>) -> (i32, i32) {
    %c0_i32 = arith.constant 0 : i32
    %c0_i32_0 = arith.constant 0 : i32
    %c0_i32_1 = arith.constant 0 : i32
    return %c0_i32, %c0_i32_0 : i32, i32
  }
  func.func @transform_7(%arg0: i32, %arg1: memref<3xi32, #tpu.memory_space<smem>>) -> (i32, i32, i32) {
    %c0_i32 = arith.constant 0 : i32
    %c0_i32_0 = arith.constant 0 : i32
    %c0_i32_1 = arith.constant 0 : i32
    return %arg0, %c0_i32, %c0_i32_0 : i32, i32, i32
  }
}

</mosaic_0001>

<llo_original>
// kernel: tpu_custom_call.1
$region0: #{tpu_custom_call.1}
  #allocation0 [shape = 'u32[]', space=smem, size = 0x4, offset = 0x4, fixed_abs, tag = 'smem constant byte address 0x4 - core index']
  #allocation1 [shape = 'u32[144,128]{1,0:T(1,128)}', space=vmem, size = 0x12000, scoped, tag = 'internal scratch']
  #allocation2 [shape = 'f32[64,64]{1,0:T(8,128)}', space=vmem, size = 0x8000, scoped, tag = 'scratch operand']
  #allocation3 [shape = 'f32[8,32]{1,0:T(8,128)}', space=vmem, size = 0x1000, scoped, tag = 'scratch operand']
  #allocation4 [shape = 's32[1]{0}', space=sflag, size = 0x4, scoped, tag = 'scoped memory for tpu_custom_call.1']
  #allocation5 [shape = 'u8[512]{0}', space=smem, size = 0x200, scoped, tag = 'prefetched SMEM operand 0']
  %s0 = inlined_call_operand.vmem [shape: s32[3], index: 0, kind: input, shape index: {}]
  %s1 = inlined_call_operand.vmem [shape: bf16[3,8,32], index: 1, kind: input, shape index: {}]
  %s2 = inlined_call_operand.vmem [shape: f32[3,8,2], index: 2, kind: input, shape index: {}]
  %s3 = inlined_call_operand.vmem [shape: f32[2,64], index: 3, kind: input, shape index: {}]
  %s4 = inlined_call_operand.vmem [shape: bf16[32,64], index: 4, kind: input, shape index: {}]
  %s5 = inlined_call_operand.vmem [shape: f32[1,64], index: 5, kind: input, shape index: {}]
  %s6 = inlined_call_operand.vmem [shape: bf16[64,32], index: 6, kind: input, shape index: {}]
  %s7 = inlined_call_operand.vmem [shape: f32[1,32], index: 7, kind: input, shape index: {}]
  %s8 = inlined_call_operand.hbm [shape: f32[3,8,32], index: 8, kind: output, shape index: {}]
  %s9 = sld [smem:[#allocation0]]
  $region61: #{tpu_custom_call.1} parent=0
    _
  %s11 = ssub.s32 1, %s9
  %s12 = scalar_select 0, %s11, %s9
  %s13 = sshll.u32 %s0, 4
  %s14 = int_to_ptr.vmem [resolvable:$true] %s13
  %16 = dma.vmem_to_smem %s14, 16, [#allocation5], [#allocation4]
  %17 = dma.done [#allocation4], 16
  %18 = sfence
  $region1: #{tpu_custom_call.1} parent=0
    #allocation6 [shape = 'u8[8192]{0}', space=vmem, size = 0x2000, scoped, tag = 'output window, operand 0']
    #allocation7 [shape = 's32[2]{0}', space=sflag, size = 0x8, scoped, tag = 'scoped memory for tpu_custom_call.1']
    %19 = vsyncpa [#allocation7], 0
    %s20 = scalar_lea.sflag [#allocation7], 1
    %21 = vsyncpa %s20, 0
    loop: start=0, step=1, limit=5
    $region2: #{tpu_custom_call.1} parent=1 // loop_pre_header
      _
    $region3: #{tpu_custom_call.1} parent=1 // loop_header
      %s23 = sphi 0, %s27
      %p24 = scmp.ge.s32.totalorder %s23, 5
      %s33 = sphi 0, %s35
      %s36 = sphi 0, %s33
      %s37 = sphi 0, %s36
      %s53 = sphi 0, %s37
      %s59 = sphi 0, %s61
      %s62 = sphi 0, %s59
      %s63 = sphi 0, %s62
      %s79 = sphi 0, %s63
      %s83 = sphi 0, %s83
      %s85 = sphi 0, %s83
      %s86 = sphi 0, %s85
      %s100 = sphi 0, %s86
      %s104 = sphi 0, %s104
      %s106 = sphi 0, %s104
      %s107 = sphi 0, %s106
      %s121 = sphi 0, %s107
      %s125 = sphi 0, %s125
      %s127 = sphi 0, %s125
      %s128 = sphi 0, %s127
      %s142 = sphi 0, %s128
      %s146 = sphi 0, %s146
      %s148 = sphi 0, %s146
      %s149 = sphi 0, %s148
      %s163 = sphi 0, %s149
      %s167 = sphi 0, %s167
      %s169 = sphi 0, %s167
      %s170 = sphi 0, %s169
      %s184 = sphi 0, %s170
      %s190 = sphi 0, %s192
      %s193 = sphi 0, %s190
      %s194 = sphi 0, %s193
      %s210 = sphi 0, %s194
    $region4: #{tpu_custom_call.1} parent=1 // loop_header_branch
      %26 = sbr.rel (%p24) target = $region8
    $region5: #{tpu_custom_call.1} parent=1 // loop_body
      %s28 = ssub.s32 %s23, 1
      %s29 = ssub.s32 %s23, 2
      %s30 = sadd.s32 %s23, 1
      %s31 = ssub.s32 %s23, %s30
      %p32 = scmp.eq.s32.totalorder %s31, 0
      %s34 = sadd.s32 %s33, 1
      %s35 = scalar_select %p32, %s33, %s34
      %p38 = pneg %p32
      %p39 = scmp.eq.s32.totalorder %s23, 2
      %p40 = por %p38, %p39
      %p41 = scmp.ne.s32.totalorder %s33, %s36
      %p42 = scmp.eq.s32.totalorder %s23, 0
      %p43 = por %p41, %p42
      %p44 = scmp.ne.s32.totalorder %s33, %s36
      %p45 = scmp.eq.s32.totalorder %s28, 2
      %p46 = por %p44, %p45
      %p47 = scmp.ne.s32.totalorder %s36, %s37
      %p48 = scmp.eq.s32.totalorder %s28, 0
      %p49 = por %p47, %p48
      %p50 = scmp.ne.s32.totalorder %s36, %s37
      %p51 = scmp.eq.s32.totalorder %s29, 2
      %p52 = por %p50, %p51
      %p54 = scmp.ne.s32.totalorder %s37, %s53
      %p55 = scmp.eq.s32.totalorder %s29, 0
      %p56 = por %p54, %p55
      %s57 = ssub.s32 %s23, %s30
      %p58 = scmp.eq.s32.totalorder %s57, 0
      %s60 = sadd.s32 %s59, 1
      %s61 = scalar_select %p58, %s59, %s60
      %p64 = pneg %p58
      %p65 = scmp.eq.s32.totalorder %s23, 2
      %p66 = por %p64, %p65
      %p67 = scmp.ne.s32.totalorder %s59, %s62
      %p68 = scmp.eq.s32.totalorder %s23, 0
      %p69 = por %p67, %p68
      %p70 = scmp.ne.s32.totalorder %s59, %s62
      %p71 = scmp.eq.s32.totalorder %s28, 2
      %p72 = por %p70, %p71
      %p73 = scmp.ne.s32.totalorder %s62, %s63
      %p74 = scmp.eq.s32.totalorder %s28, 0
      %p75 = por %p73, %p74
      %p76 = scmp.ne.s32.totalorder %s62, %s63
      %p77 = scmp.eq.s32.totalorder %s29, 2
      %p78 = por %p76, %p77
      %p80 = scmp.ne.s32.totalorder %s63, %s79
      %p81 = scmp.eq.s32.totalorder %s29, 0
      %p82 = por %p80, %p81
      %s84 = sadd.s32 %s83, 1
      %p87 = scmp.eq.s32.totalorder %s23, 2
      %p88 = scmp.ne.s32.totalorder %s83, %s85
      %p89 = scmp.eq.s32.totalorder %s23, 0
      %p90 = por %p88, %p89
      %p91 = scmp.ne.s32.totalorder %s83, %s85
      %p92 = scmp.eq.s32.totalorder %s28, 2
      %p93 = por %p91, %p92
      %p94 = scmp.ne.s32.totalorder %s85, %s86
      %p95 = scmp.eq.s32.totalorder %s28, 0
      %p96 = por %p94, %p95
      %p97 = scmp.ne.s32.totalorder %s85, %s86
      %p98 = scmp.eq.s32.totalorder %s29, 2
      %p99 = por %p97, %p98
      %p101 = scmp.ne.s32.totalorder %s86, %s100
      %p102 = scmp.eq.s32.totalorder %s29, 0
      %p103 = por %p101, %p102
      %s105 = sadd.s32 %s104, 1
      %p108 = scmp.eq.s32.totalorder %s23, 2
      %p109 = scmp.ne.s32.totalorder %s104, %s106
      %p110 = scmp.eq.s32.totalorder %s23, 0
      %p111 = por %p109, %p110
      %p112 = scmp.ne.s32.totalorder %s104, %s106
      %p113 = scmp.eq.s32.totalorder %s28, 2
      %p114 = por %p112, %p113
      %p115 = scmp.ne.s32.totalorder %s106, %s107
      %p116 = scmp.eq.s32.totalorder %s28, 0
      %p117 = por %p115, %p116
      %p118 = scmp.ne.s32.totalorder %s106, %s107
      %p119 = scmp.eq.s32.totalorder %s29, 2
      %p120 = por %p118, %p119
      %p122 = scmp.ne.s32.totalorder %s107, %s121
      %p123 = scmp.eq.s32.totalorder %s29, 0
      %p124 = por %p122, %p123
      %s126 = sadd.s32 %s125, 1
      %p129 = scmp.eq.s32.totalorder %s23, 2
      %p130 = scmp.ne.s32.totalorder %s125, %s127
      %p131 = scmp.eq.s32.totalorder %s23, 0
      %p132 = por %p130, %p131
      %p133 = scmp.ne.s32.totalorder %s125, %s127
      %p134 = scmp.eq.s32.totalorder %s28, 2
      %p135 = por %p133, %p134
      %p136 = scmp.ne.s32.totalorder %s127, %s128
      %p137 = scmp.eq.s32.totalorder %s28, 0
      %p138 = por %p136, %p137
      %p139 = scmp.ne.s32.totalorder %s127, %s128
      %p140 = scmp.eq.s32.totalorder %s29, 2
      %p141 = por %p139, %p140
      %p143 = scmp.ne.s32.totalorder %s128, %s142
      %p144 = scmp.eq.s32.totalorder %s29, 0
      %p145 = por %p143, %p144
      %s147 = sadd.s32 %s146, 1
      %p150 = scmp.eq.s32.totalorder %s23, 2
      %p151 = scmp.ne.s32.totalorder %s146, %s148
      %p152 = scmp.eq.s32.totalorder %s23, 0
      %p153 = por %p151, %p152
      %p154 = scmp.ne.s32.totalorder %s146, %s148
      %p155 = scmp.eq.s32.totalorder %s28, 2
      %p156 = por %p154, %p155
      %p157 = scmp.ne.s32.totalorder %s148, %s149
      %p158 = scmp.eq.s32.totalorder %s28, 0
      %p159 = por %p157, %p158
      %p160 = scmp.ne.s32.totalorder %s148, %s149
      %p161 = scmp.eq.s32.totalorder %s29, 2
      %p162 = por %p160, %p161
      %p164 = scmp.ne.s32.totalorder %s149, %s163
      %p165 = scmp.eq.s32.totalorder %s29, 0
      %p166 = por %p164, %p165
      %s168 = sadd.s32 %s167, 1
      %p171 = scmp.eq.s32.totalorder %s23, 2
      %p172 = scmp.ne.s32.totalorder %s167, %s169
      %p173 = scmp.eq.s32.totalorder %s23, 0
      %p174 = por %p172, %p173
      %p175 = scmp.ne.s32.totalorder %s167, %s169
      %p176 = scmp.eq.s32.totalorder %s28, 2
      %p177 = por %p175, %p176
      %p178 = scmp.ne.s32.totalorder %s169, %s170
      %p179 = scmp.eq.s32.totalorder %s28, 0
      %p180 = por %p178, %p179
      %p181 = scmp.ne.s32.totalorder %s169, %s170
      %p182 = scmp.eq.s32.totalorder %s29, 2
      %p183 = por %p181, %p182
      %p185 = scmp.ne.s32.totalorder %s170, %s184
      %p186 = scmp.eq.s32.totalorder %s29, 0
      %p187 = por %p185, %p186
      %s188 = ssub.s32 %s23, %s30
      %p189 = scmp.eq.s32.totalorder %s188, 0
      %s191 = sadd.s32 %s190, 1
      %s192 = scalar_select %p189, %s190, %s191
      %p195 = pneg %p189
      %p196 = scmp.eq.s32.totalorder %s23, 2
      %p197 = por %p195, %p196
      %p198 = scmp.ne.s32.totalorder %s190, %s193
      %p199 = scmp.eq.s32.totalorder %s23, 0
      %p200 = por %p198, %p199
      %p201 = scmp.ne.s32.totalorder %s190, %s193
      %p202 = scmp.eq.s32.totalorder %s28, 2
      %p203 = por %p201, %p202
      %p204 = scmp.ne.s32.totalorder %s193, %s194
      %p205 = scmp.eq.s32.totalorder %s28, 0
      %p206 = por %p204, %p205
      %p207 = scmp.ne.s32.totalorder %s193, %s194
      %p208 = scmp.eq.s32.totalorder %s29, 2
      %p209 = por %p207, %p208
      %p211 = scmp.ne.s32.totalorder %s194, %s210
      %p212 = scmp.eq.s32.totalorder %s29, 0
      %p213 = por %p211, %p212
      %p214 = scmp.le.s32.totalorder 1, %s23
      %p215 = scmp.lt.s32.totalorder %s23, 4
      %p216 = pnand %p214, %p215
      %p217 = pneg %p216
      // Predicated region
      $region9: #{tpu_custom_call.1} parent=5 // pred_check
        _
      $region10: #{tpu_custom_call.1} parent=5 // pred_check_branch
        %219 = sbr.rel (%p216) target = $region12
      $region11: #{tpu_custom_call.1} parent=5 // pred_region
        %s220 = ssub.s32 %s23, 1
        // Predicated region
        $region13: #{tpu_custom_call.1} parent=11 // pred_check
          %p221 = pneg %p96
        $region14: #{tpu_custom_call.1} parent=11 // pred_check_branch
          %223 = sbr.rel (%p221) target = $region16
        $region15: #{tpu_custom_call.1} parent=11 // pred_region
          _
        $region16: #{tpu_custom_call.1} parent=11 // pred_fallthru
          _
        // Predicated region
        $region17: #{tpu_custom_call.1} parent=11 // pred_check
          %p224 = pneg %p117
        $region18: #{tpu_custom_call.1} parent=11 // pred_check_branch
          %226 = sbr.rel (%p224) target = $region20
        $region19: #{tpu_custom_call.1} parent=11 // pred_region
          _
        $region20: #{tpu_custom_call.1} parent=11 // pred_fallthru
          _
        // Predicated region
        $region21: #{tpu_custom_call.1} parent=11 // pred_check
          %p227 = pneg %p138
        $region22: #{tpu_custom_call.1} parent=11 // pred_check_branch
          %229 = sbr.rel (%p227) target = $region24
        $region23: #{tpu_custom_call.1} parent=11 // pred_region
          _
        $region24: #{tpu_custom_call.1} parent=11 // pred_fallthru
          _
        // Predicated region
        $region25: #{tpu_custom_call.1} parent=11 // pred_check
          %p230 = pneg %p159
        $region26: #{tpu_custom_call.1} parent=11 // pred_check_branch
          %232 = sbr.rel (%p230) target = $region28
        $region27: #{tpu_custom_call.1} parent=11 // pred_region
          _
        $region28: #{tpu_custom_call.1} parent=11 // pred_fallthru
          _
        // Predicated region
        $region29: #{tpu_custom_call.1} parent=11 // pred_check
          %p233 = pneg %p180
        $region30: #{tpu_custom_call.1} parent=11 // pred_check_branch
          %235 = sbr.rel (%p233) target = $region32
        $region31: #{tpu_custom_call.1} parent=11 // pred_region
          _
        $region32: #{tpu_custom_call.1} parent=11 // pred_fallthru
          _
      $region12: #{tpu_custom_call.1} parent=5 // pred_fallthru
        _
      %p236 = scmp.lt.s32.totalorder %s23, 3
      // Predicated region
      $region33: #{tpu_custom_call.1} parent=5 // pred_check
        %p237 = pneg %p236
      $region34: #{tpu_custom_call.1} parent=5 // pred_check_branch
        %239 = sbr.rel (%p237) target = $region36
      $region35: #{tpu_custom_call.1} parent=5 // pred_region
        // Predicated region
        $region37: #{tpu_custom_call.1} parent=35 // pred_check
          %p240 = pneg %p43
        $region38: #{tpu_custom_call.1} parent=35 // pred_check_branch
          %242 = sbr.rel (%p240) target = $region40
        $region39: #{tpu_custom_call.1} parent=35 // pred_region
          %p243 = scmp.lt.s32.totalorder %s23, 2
          %s244 = scalar_select %p243, %s23, 2
          %s245 = smul.addr %s244, 4
          %s246 = scalar_lea.vmem %s1, %s245
        $region40: #{tpu_custom_call.1} parent=35 // pred_fallthru
          _
        // Predicated region
        $region41: #{tpu_custom_call.1} parent=35 // pred_check
          %p247 = pneg %p69
        $region42: #{tpu_custom_call.1} parent=35 // pred_check_branch
          %249 = sbr.rel (%p247) target = $region44
        $region43: #{tpu_custom_call.1} parent=35 // pred_region
          %p250 = scmp.lt.s32.totalorder %s23, 2
          %s251 = scalar_select %p250, %s23, 2
          %s252 = smul.addr %s251, 8
          %s253 = scalar_lea.vmem %s2, %s252
        $region44: #{tpu_custom_call.1} parent=35 // pred_fallthru
          _
      $region36: #{tpu_custom_call.1} parent=5 // pred_fallthru
        _
      %p254 = scmp.le.s32.totalorder 1, %s23
      %p255 = scmp.lt.s32.totalorder %s23, 4
      %p256 = pnand %p254, %p255
      %p257 = pneg %p256
      // Predicated region
      $region45: #{tpu_custom_call.1} parent=5 // pred_check
        _
      $region46: #{tpu_custom_call.1} parent=5 // pred_check_branch
        %259 = sbr.rel (%p256) target = $region48
      $region47: #{tpu_custom_call.1} parent=5 // pred_region
        %s260 = ssub.s32 %s23, 1
        %p261 = scmp.lt.s32.totalorder %s28, 2
        %s262 = scalar_select %p261, %s28, 2
        %s263 = smul.addr %s262, 4
        %s264 = scalar_lea.vmem %s1, %s263
        %p265 = pneg %p49
        %p266 = pneg %p46
        %p267 = scmp.lt.s32.totalorder %s28, 2
        %s268 = scalar_select %p267, %s28, 2
        %s269 = smul.addr %s268, 8
        %s270 = scalar_lea.vmem %s2, %s269
        %p271 = pneg %p75
        %p272 = pneg %p72
        %p273 = pneg %p96
        %p274 = pneg %p93
        %p275 = pneg %p117
        %p276 = pneg %p114
        %p277 = pneg %p138
        %p278 = pneg %p135
        %p279 = pneg %p159
        %p280 = pneg %p156
        %p281 = pneg %p180
        %p282 = pneg %p177
        %p283 = pneg %p206
        %p284 = pneg %p203
        %s285 = sand.u32 %s193, 1
        %s286 = scalar_lea.sflag [#allocation7], %s285
        %s287 = sand.u32 %s193, 1
        %s288 = smul.addr %s287, 8
        %s289 = scalar_lea.vmem [#allocation6], %s288
        %p290 = scmp.lt.s32.totalorder %s28, 2
        %s291 = scalar_select %p290, %s28, 2
        %s292 = smul.addr %s291, 4
        %s293 = scalar_lea.vmem %s1, %s292
        %p294 = scmp.lt.s32.totalorder %s28, 2
        %s295 = scalar_select %p294, %s28, 2
        %s296 = smul.addr %s295, 8
        %s297 = scalar_lea.vmem %s2, %s296
        %s299 = sld [smem:[#allocation5 + %s28]]
        %v300 = vld [vmem:[%s293] sm:$0xf]
        %v301 = vld [vmem:[%s297] sm:$0xff]
        %v302 = vld [vmem:[%s3] sm:$0x3]
        %304 = vset.pattern.permute.xlu0 0
        %305 = vperm.xlu0 %304, %v301
        %v306 = vpop.permute.xlu0 %305
        %v308 = vlaneseq
        %v309 = vshrl.u32 %v308, 7
        %v310 = vsub.s32 0, %v309
        %v311 = vrot.slane %v302, %v310
        %v312 = vmul.f32 %v306, %v311
        %313 = vset.pattern.permute.xlu0 1
        %314 = vperm.xlu0 %313, %v301
        %v315 = vpop.permute.xlu0 %314
        %v317 = vlaneseq
        %v318 = vshrl.u32 %v317, 7
        %v319 = vsub.s32 1, %v318
        %v320 = vrot.slane %v302, %v319
        %v321 = vmul.f32 %v315, %v320
        %v322 = vadd.f32 %v312, %v321
        %v323 = vld [vmem:[%s4] sm:$0xf]
        %v324 = vld [vmem:[%s4 + $0x4] sm:$0xf]
        %v325 = vld [vmem:[%s4 + $0x8] sm:$0xf]
        %v326 = vld [vmem:[%s4 + $0xc] sm:$0xf]
        %v331 = vunpack.c.l.b16 %v323
        %v332 = vunpack.c.l.b16 %v324
        %v333 = vunpack.c.l.b16 %v325
        %v334 = vunpack.c.l.b16 %v326
        %v335 = vpack.c.b16 %v332, %v331
        %v336 = vpack.c.b16 %v334, %v333
        %vm339 = vcmask 261120
        %v341 = vsel %vm339, %v300, 0
        %343 = vmatprep.subr.bf16.mxu0 0
        %344 = vmatpush1.bf16.msra.mxu0 %v335
        %345 = vmatprep.subr.bf16.mxu0 0
        %346 = vmatpush1.bf16.msra.mxu0 %v336
        %347 = vmatprep.subr.bf16.mxu0 0
        %348 = vmatpush1.bf16.msra.mxu0 0
        %349 = vmatprep.subr.bf16.mxu0 0
        %350 = vmatpush1.bf16.msra.mxu0 0
        %351 = vmatprep.subr.bf16.mxu0 0
        %352 = vmatpush1.bf16.msra.mxu0 0
        %353 = vmatprep.subr.bf16.mxu0 0
        %354 = vmatpush1.bf16.msra.mxu0 0
        %355 = vmatprep.subr.bf16.mxu0 0
        %356 = vmatpush1.bf16.msra.mxu0 0
        %357 = vmatprep.subr.bf16.mxu0 0
        %358 = vmatpush1.bf16.msra.mxu0 0
        %359 = vmatprep.subr.bf16.mxu0 0
        %360 = vmatpush1.bf16.msra.mxu0 0
        %361 = vmatprep.subr.bf16.mxu0 0
        %362 = vmatpush1.bf16.msra.mxu0 0
        %363 = vmatprep.subr.bf16.mxu0 0
        %364 = vmatpush1.bf16.msra.mxu0 0
        %365 = vmatprep.subr.bf16.mxu0 0
        %366 = vmatpush1.bf16.msra.mxu0 0
        %367 = vmatprep.subr.bf16.mxu0 0
        %368 = vmatpush1.bf16.msra.mxu0 0
        %369 = vmatprep.subr.bf16.mxu0 0
        %370 = vmatpush1.bf16.msra.mxu0 0
        %371 = vmatprep.subr.bf16.mxu0 0
        %372 = vmatpush1.bf16.msra.mxu0 0
        %373 = vmatprep.subr.bf16.mxu0 0
        %374 = vmatpush1.bf16.msra.mxu0 0
        %375 = vmatprep.mubr.bf16.mxu0 0
        %376 = vmatmul.mubr.bf16.gmra.mrb[0].mxu0 %v341
        %v377 = vpop.f32.mrb[0].mxu0
        %v378 = vadd.f32 %v322, %v377
        %v379 = vpop.f32.mrb[0].mxu0
        %v380 = vpop.f32.mrb[0].mxu0
        %v381 = vpop.f32.mrb[0].mxu0
        %382 = vdwg.mxu0
        %v383 = vld [vmem:[%s5] sm:$0x1]
        %v385 = vlaneseq
        %v386 = vshrl.u32 %v385, 7
        %v387 = vsub.s32 0, %v386
        %v388 = vrot.slane %v383, %v387
        %v390 = vadd.f32 %v378, %v388
        %v391 = vlaneseq
        %v392 = vshrl.u32 %v391, 7
        %v393 = vsub.s32 0, %v392
        %v394 = vrot.slane %v322, %v393
        %v395 = vsub.f32 %v390, %v394
        %v396 = vmax.f32 %v395, 0.0
        %vm397 = vcmask 523264
        %398 = vst.msk [vmem:[#allocation2] sm:$0xff] %vm397, %v396
        %v399 = vlaneseq
        %v400 = vshrl.u32 %v399, 7
        %v401 = vsub.s32 1, %v400
        %v402 = vrot.slane %v322, %v401
        %v403 = vsub.f32 %v390, %v402
        %v404 = vmax.f32 %v403, 0.0
        %405 = vst.msk [vmem:[#allocation2 + $0x8] sm:$0xff] %vm397, %v404
        %v406 = vlaneseq
        %v407 = vshrl.u32 %v406, 7
        %v408 = vsub.s32 2, %v407
        %v409 = vrot.slane %v322, %v408
        %v410 = vsub.f32 %v390, %v409
        %v411 = vmax.f32 %v410, 0.0
        %412 = vst.msk [vmem:[#allocation2 + $0x10] sm:$0xff] %vm397, %v411
        %v413 = vlaneseq
        %v414 = vshrl.u32 %v413, 7
        %v415 = vsub.s32 3, %v414
        %v416 = vrot.slane %v322, %v415
        %v417 = vsub.f32 %v390, %v416
        %v418 = vmax.f32 %v417, 0.0
        %419 = vst.msk [vmem:[#allocation2 + $0x18] sm:$0xff] %vm397, %v418
        %v420 = vlaneseq
        %v421 = vshrl.u32 %v420, 7
        %v422 = vsub.s32 4, %v421
        %v423 = vrot.slane %v322, %v422
        %v424 = vsub.f32 %v390, %v423
        %v425 = vmax.f32 %v424, 0.0
        %426 = vst.msk [vmem:[#allocation2 + $0x20] sm:$0xff] %vm397, %v425
        %v427 = vlaneseq
        %v428 = vshrl.u32 %v427, 7
        %v429 = vsub.s32 5, %v428
        %v430 = vrot.slane %v322, %v429
        %v431 = vsub.f32 %v390, %v430
        %v432 = vmax.f32 %v431, 0.0
        %433 = vst.msk [vmem:[#allocation2 + $0x28] sm:$0xff] %vm397, %v432
        %v434 = vlaneseq
        %v435 = vshrl.u32 %v434, 7
        %v436 = vsub.s32 6, %v435
        %v437 = vrot.slane %v322, %v436
        %v438 = vsub.f32 %v390, %v437
        %v439 = vmax.f32 %v438, 0.0
        %440 = vst.msk [vmem:[#allocation2 + $0x30] sm:$0xff] %vm397, %v439
        %v441 = vlaneseq
        %v442 = vshrl.u32 %v441, 7
        %v443 = vsub.s32 7, %v442
        %v444 = vrot.slane %v322, %v443
        %v445 = vsub.f32 %v390, %v444
        %v446 = vmax.f32 %v445, 0.0
        %447 = vst.msk [vmem:[#allocation2 + $0x38] sm:$0xff] %vm397, %v446
        %v448 = vld [vmem:[#allocation2] sm:$0xff]
        %v449 = vld [vmem:[#allocation2 + $0x8] sm:$0xff]
        %v450 = vld [vmem:[#allocation2 + $0x10] sm:$0xff]
        %v451 = vld [vmem:[#allocation2 + $0x18] sm:$0xff]
        %v452 = vld [vmem:[#allocation2 + $0x20] sm:$0xff]
        %v453 = vld [vmem:[#allocation2 + $0x28] sm:$0xff]
        %v454 = vld [vmem:[#allocation2 + $0x30] sm:$0xff]
        %v455 = vld [vmem:[#allocation2 + $0x38] sm:$0xff]
        %v456 = vpack.c.bf16 %v449, %v448
        %v457 = vpack.c.bf16 %v451, %v450
        %v458 = vpack.c.bf16 %v453, %v452
        %v459 = vpack.c.bf16 %v455, %v454
        %v460 = vld [vmem:[%s6] sm:$0xf]
        %v461 = vld [vmem:[%s6 + $0x4] sm:$0xf]
        %v462 = vld [vmem:[%s6 + $0x8] sm:$0xf]
        %v463 = vld [vmem:[%s6 + $0xc] sm:$0xf]
        %v464 = vld [vmem:[%s6 + $0x10] sm:$0xf]
        %v465 = vld [vmem:[%s6 + $0x14] sm:$0xf]
        %v466 = vld [vmem:[%s6 + $0x18] sm:$0xf]
        %v467 = vld [vmem:[%s6 + $0x1c] sm:$0xf]
        %v468 = vld [vmem:[%s7] sm:$0x1]
        %v470 = vlaneseq
        %v471 = vshrl.u32 %v470, 7
        %v472 = vsub.s32 0, %v471
        %v473 = vrot.slane %v468, %v472
        %v483 = vunpack.c.l.b16 %v460
        %v484 = vunpack.c.l.b16 %v461
        %v485 = vunpack.c.l.b16 %v462
        %v486 = vunpack.c.l.b16 %v463
        %v487 = vunpack.c.l.b16 %v464
        %v488 = vunpack.c.l.b16 %v465
        %v489 = vunpack.c.l.b16 %v466
        %v490 = vunpack.c.l.b16 %v467
        %v491 = vpack.c.b16 %v484, %v483
        %v492 = vpack.c.b16 %v486, %v485
        %v493 = vpack.c.b16 %v488, %v487
        %v494 = vpack.c.b16 %v490, %v489
        %v500 = vsel %vm397, %v456, 0
        %v503 = vsel %vm397, %v457, 0
        %v506 = vsel %vm397, %v458, 0
        %v509 = vsel %vm397, %v459, 0
        %511 = vmatprep.subr.bf16.mxu0 0
        %512 = vmatpush1.bf16.msra.mxu0 %v491
        %513 = vmatprep.subr.bf16.mxu0 0
        %514 = vmatpush1.bf16.msra.mxu0 %v492
        %515 = vmatprep.subr.bf16.mxu0 0
        %516 = vmatpush1.bf16.msra.mxu0 %v493
        %517 = vmatprep.subr.bf16.mxu0 0
        %518 = vmatpush1.bf16.msra.mxu0 %v494
        %519 = vmatprep.subr.bf16.mxu0 0
        %520 = vmatpush1.bf16.msra.mxu0 0
        %521 = vmatprep.subr.bf16.mxu0 0
        %522 = vmatpush1.bf16.msra.mxu0 0
        %523 = vmatprep.subr.bf16.mxu0 0
        %524 = vmatpush1.bf16.msra.mxu0 0
        %525 = vmatprep.subr.bf16.mxu0 0
        %526 = vmatpush1.bf16.msra.mxu0 0
        %527 = vmatprep.subr.bf16.mxu0 0
        %528 = vmatpush1.bf16.msra.mxu0 0
        %529 = vmatprep.subr.bf16.mxu0 0
        %530 = vmatpush1.bf16.msra.mxu0 0
        %531 = vmatprep.subr.bf16.mxu0 0
        %532 = vmatpush1.bf16.msra.mxu0 0
        %533 = vmatprep.subr.bf16.mxu0 0
        %534 = vmatpush1.bf16.msra.mxu0 0
        %535 = vmatprep.subr.bf16.mxu0 0
        %536 = vmatpush1.bf16.msra.mxu0 0
        %537 = vmatprep.subr.bf16.mxu0 0
        %538 = vmatpush1.bf16.msra.mxu0 0
        %539 = vmatprep.subr.bf16.mxu0 0
        %540 = vmatpush1.bf16.msra.mxu0 0
        %541 = vmatprep.subr.bf16.mxu0 0
        %542 = vmatpush1.bf16.msra.mxu0 0
        %543 = vmatprep.mubr.bf16.mxu0 0
        %544 = vmatmul.mubr.bf16.gmra.mrb[0].mxu0 %v500
        %v545 = vpop.f32.mrb[0].mxu0
        %v546 = vadd.f32 %v473, %v545
        %v547 = vpop.f32.mrb[0].mxu0
        %v548 = vpop.f32.mrb[0].mxu0
        %v549 = vadd.f32 %v473, %v548
        %v550 = vpop.f32.mrb[0].mxu0
        %551 = vmatprep.mubr.bf16.mxu0 0
        %552 = vmatmul.mubr.bf16.gmra.mrb[0].mxu0 %v503
        %v553 = vpop.f32.mrb[0].mxu0
        %v554 = vadd.f32 %v473, %v553
        %v555 = vpop.f32.mrb[0].mxu0
        %v556 = vpop.f32.mrb[0].mxu0
        %v557 = vadd.f32 %v473, %v556
        %v558 = vpop.f32.mrb[0].mxu0
        %559 = vmatprep.mubr.bf16.mxu0 0
        %560 = vmatmul.mubr.bf16.gmra.mrb[0].mxu0 %v506
        %v561 = vpop.f32.mrb[0].mxu0
        %v562 = vadd.f32 %v473, %v561
        %v563 = vpop.f32.mrb[0].mxu0
        %v564 = vpop.f32.mrb[0].mxu0
        %v565 = vadd.f32 %v473, %v564
        %v566 = vpop.f32.mrb[0].mxu0
        %567 = vmatprep.mubr.bf16.mxu0 0
        %568 = vmatmul.mubr.bf16.gmra.mrb[0].mxu0 %v509
        %v569 = vpop.f32.mrb[0].mxu0
        %v570 = vadd.f32 %v473, %v569
        %v571 = vpop.f32.mrb[0].mxu0
        %v572 = vpop.f32.mrb[0].mxu0
        %v573 = vadd.f32 %v473, %v572
        %v574 = vpop.f32.mrb[0].mxu0
        %575 = vdwg.mxu0
        %v576 = vmax.f32 %v546, 0.0
        %v577 = vmax.f32 %v549, 0.0
        %v578 = vmax.f32 %v554, 0.0
        %v579 = vmax.f32 %v557, 0.0
        %v580 = vmax.f32 %v562, 0.0
        %v581 = vmax.f32 %v565, 0.0
        %v582 = vmax.f32 %v570, 0.0
        %v583 = vmax.f32 %v573, 0.0
        %v584 = vlaneseq
        %v585 = vshrl.u32 %v584, 7
        %v586 = vstv %s299
        %vm587 = vcmp.lt.s32.totalorder %v585, %v586
        %v588 = vsel %vm587, 1, 0
        %vm589 = vcmp.eq.s32.totalorder %v588, 1
        %v590 = vsel %vm589, %v576, 0.0
        %v591 = vsel %vm339, %v590, -inf
        %v592 = vrot.slane %v591, 4
        %v593 = vmax.f32 %v591, %v592
        %v594 = vrot.slane %v593, 2
        %v595 = vmax.f32 %v593, %v594
        %v596 = vrot.slane %v595, 1
        %v597 = vmax.f32 %v595, %v596
        %vm598 = vcmask 253952
        %599 = vst.msk [vmem:[#allocation3] sm:$0x1] %vm598, %v597
        %v600 = vsel %vm589, %v577, 0.0
        %v601 = vsel %vm339, %v600, -inf
        %v602 = vrot.slane %v601, 4
        %v603 = vmax.f32 %v601, %v602
        %v604 = vrot.slane %v603, 2
        %v605 = vmax.f32 %v603, %v604
        %v606 = vrot.slane %v605, 1
        %v607 = vmax.f32 %v605, %v606
        %608 = vst.msk [vmem:[#allocation3 + $0x1] sm:$0x1] %vm598, %v607
        %v609 = vsel %vm589, %v578, 0.0
        %v610 = vsel %vm339, %v609, -inf
        %v611 = vrot.slane %v610, 4
        %v612 = vmax.f32 %v610, %v611
        %v613 = vrot.slane %v612, 2
        %v614 = vmax.f32 %v612, %v613
        %v615 = vrot.slane %v614, 1
        %v616 = vmax.f32 %v614, %v615
        %617 = vst.msk [vmem:[#allocation3 + $0x2] sm:$0x1] %vm598, %v616
        %v618 = vsel %vm589, %v579, 0.0
        %v619 = vsel %vm339, %v618, -inf
        %v620 = vrot.slane %v619, 4
        %v621 = vmax.f32 %v619, %v620
        %v622 = vrot.slane %v621, 2
        %v623 = vmax.f32 %v621, %v622
        %v624 = vrot.slane %v623, 1
        %v625 = vmax.f32 %v623, %v624
        %626 = vst.msk [vmem:[#allocation3 + $0x3] sm:$0x1] %vm598, %v625
        %v627 = vsel %vm589, %v580, 0.0
        %v628 = vsel %vm339, %v627, -inf
        %v629 = vrot.slane %v628, 4
        %v630 = vmax.f32 %v628, %v629
        %v631 = vrot.slane %v630, 2
        %v632 = vmax.f32 %v630, %v631
        %v633 = vrot.slane %v632, 1
        %v634 = vmax.f32 %v632, %v633
        %635 = vst.msk [vmem:[#allocation3 + $0x4] sm:$0x1] %vm598, %v634
        %v636 = vsel %vm589, %v581, 0.0
        %v637 = vsel %vm339, %v636, -inf
        %v638 = vrot.slane %v637, 4
        %v639 = vmax.f32 %v637, %v638
        %v640 = vrot.slane %v639, 2
        %v641 = vmax.f32 %v639, %v640
        %v642 = vrot.slane %v641, 1
        %v643 = vmax.f32 %v641, %v642
        %644 = vst.msk [vmem:[#allocation3 + $0x5] sm:$0x1] %vm598, %v643
        %v645 = vsel %vm589, %v582, 0.0
        %v646 = vsel %vm339, %v645, -inf
        %v647 = vrot.slane %v646, 4
        %v648 = vmax.f32 %v646, %v647
        %v649 = vrot.slane %v648, 2
        %v650 = vmax.f32 %v648, %v649
        %v651 = vrot.slane %v650, 1
        %v652 = vmax.f32 %v650, %v651
        %653 = vst.msk [vmem:[#allocation3 + $0x6] sm:$0x1] %vm598, %v652
        %v654 = vsel %vm589, %v583, 0.0
        %v655 = vsel %vm339, %v654, -inf
        %v656 = vrot.slane %v655, 4
        %v657 = vmax.f32 %v655, %v656
        %v658 = vrot.slane %v657, 2
        %v659 = vmax.f32 %v657, %v658
        %v660 = vrot.slane %v659, 1
        %v661 = vmax.f32 %v659, %v660
        %662 = vst.msk [vmem:[#allocation3 + $0x7] sm:$0x1] %vm598, %v661
        %v663 = vld [vmem:[#allocation3] sm:$0xff]
        %664 = vst.msk [vmem:[%s289] sm:$0xff] %vm339, %v663
        %s665 = sand.u32 %s193, 1
        %s666 = scalar_lea.sflag [#allocation7], %s665
        %s667 = sand.u32 %s193, 1
        %s668 = smul.addr %s667, 8
        %s669 = scalar_lea.vmem [#allocation6], %s668
        // Predicated region
        $region49: #{tpu_custom_call.1} parent=47 // pred_check
          %p670 = pneg %p203
        $region50: #{tpu_custom_call.1} parent=47 // pred_check_branch
          %672 = sbr.rel (%p670) target = $region52
        $region51: #{tpu_custom_call.1} parent=47 // pred_region
          %s674 = ssub.s32 128, 128
          %675 = vsyncadd %s666, %s674
          %s676 = smul.addr %s28, 128
          %s677 = scalar_lea.hbm %s8, %s676
          %s679 = sshll.u32 %s669, 4
          %s680 = int_to_ptr.vmem [resolvable:$true] %s679
          %682 = dma.vmem_to_hbm [thread:$0]  %s680, 128, %s677, %s666
        $region52: #{tpu_custom_call.1} parent=47 // pred_fallthru
          _
      $region48: #{tpu_custom_call.1} parent=5 // pred_fallthru
        _
      %p683 = scmp.le.s32.totalorder 2, %s23
      // Predicated region
      $region53: #{tpu_custom_call.1} parent=5 // pred_check
        %p684 = pneg %p683
      $region54: #{tpu_custom_call.1} parent=5 // pred_check_branch
        %686 = sbr.rel (%p684) target = $region56
      $region55: #{tpu_custom_call.1} parent=5 // pred_region
        %s687 = ssub.s32 %s23, 2
        // Predicated region
        $region57: #{tpu_custom_call.1} parent=55 // pred_check
          %p688 = pneg %p209
        $region58: #{tpu_custom_call.1} parent=55 // pred_check_branch
          %690 = sbr.rel (%p688) target = $region60
        $region59: #{tpu_custom_call.1} parent=55 // pred_region
          %s691 = sand.u32 %s194, 1
          %s692 = scalar_lea.sflag [#allocation7], %s691
          %s693 = sand.u32 %s194, 1
          %s694 = smul.addr %s693, 8
          %s695 = scalar_lea.vmem [#allocation6], %s694
          %696 = dma.done %s692, 128
        $region60: #{tpu_custom_call.1} parent=55 // pred_fallthru
          _
      $region56: #{tpu_custom_call.1} parent=5 // pred_fallthru
        _
    $region6: #{tpu_custom_call.1} parent=1 // loop_footer
      %s27 = sadd.s32 1, %s23
    $region7: #{tpu_custom_call.1} parent=1 // loop_footer_branch
      %22 = sbr.rel target = $region3
    $region8: #{tpu_custom_call.1} parent=1 // loop_exit
      _
    %697 = vsyncpa [#allocation7], 1
    %s698 = scalar_lea.sflag [#allocation7], 1
    %699 = vsyncpa %s698, 1

</llo_original>
